<compile_context>
chip_gen: v6e
topology: v6e:2x2x1
jax: 0.10.0
libtpu: 0.0.40
codegen_flags: <defaults>
</compile_context>

<pallas_src>
import jax
import jax.numpy as jnp
from jax.experimental import pallas as pl
from jax.experimental.pallas import tpu as pltpu

NEG_SLOPE = 0.01  # torch.nn.LeakyReLU default negative_slope


def _leaky_relu(x):
    return jnp.where(x > 0, x, NEG_SLOPE * x)


def policy_kernel(xt_ref, w1_ref, b1_ref, w2_ref, b2_ref, w3d_ref, b3d_ref, out_ref):
    # xt_ref : (4, TB)   input, batch on lanes
    # w1_ref : (64, 4), b1_ref : (64, 1)
    # w2_ref : (32, 64), b2_ref : (32, 1)
    # w3d_ref: (1, 32)  = w3[0] - w3[1], b3d_ref: (1, 1) = b3[0] - b3[1]
    # out_ref: (2, TB)   row 0 = P(action 0), row 1 = P(action 1)
    xt = xt_ref[...]
    w1 = w1_ref[...]

    # Layer 1 (4 -> 64) on the VPU: four broadcast multiply-adds instead of a
    # K=4 MXU pass that would be >96% padding.
    h1 = (b1_ref[...]
          + w1[:, 0:1] * xt[0:1, :]
          + w1[:, 1:2] * xt[1:2, :]
          + w1[:, 2:3] * xt[2:3, :]
          + w1[:, 3:4] * xt[3:4, :])            # (64, TB)
    h1 = _leaky_relu(h1)

    # Layer 2 (64 -> 32) on the MXU, f32 accumulation.
    h2 = jnp.dot(w2_ref[...], h1, preferred_element_type=jnp.float32) + b2_ref[...]
    h2 = _leaky_relu(h2)                        # (32, TB)

    # Layer 3 + softmax(2) as a sigmoid on the logit difference (exact identity).
    d = jnp.dot(w3d_ref[...], h2, preferred_element_type=jnp.float32) + b3d_ref[...]  # (1, TB)
    p0 = 1.0 / (1.0 + jnp.exp(-d))              # sigmoid -> EUP; safe for large |d|
    out_ref[...] = jnp.concatenate([p0, 1.0 - p0], axis=0).astype(out_ref.dtype)


def policy_forward(x, params, *, batch_tile=512):
    """x: (B, 4) float32. params in torch layout (w: (out, in), b: (out,)).
    Returns (B, 2) action probabilities."""
    w1, b1, w2, b2, w3, b3 = params
    B, F = x.shape
    assert F == 4
    assert batch_tile % 128 == 0, "batch_tile must be a multiple of 128 (256 on v6e/v7x)"

    # Pad batch up to a multiple of batch_tile and transpose: batch on the lane axis.
    n_tiles = pl.cdiv(B, batch_tile)
    B_pad = n_tiles * batch_tile
    xt = jnp.pad(x, ((0, B_pad - B), (0, 0))).T                  # (4, B_pad)

    # Weight/bias prep done once in the wrapper (not per grid step).
    b1c = b1.reshape(64, 1).astype(jnp.float32)
    b2c = b2.reshape(32, 1).astype(jnp.float32)
    w3d = (w3[0:1, :] - w3[1:2, :]).astype(jnp.float32)          # (1, 32)
    b3d = (b3[0] - b3[1]).reshape(1, 1).astype(jnp.float32)      # (1, 1)

    rep = lambda a: pl.BlockSpec(a.shape, lambda i: (0, 0))      # replicated small tensors

    out_t = pl.pallas_call(
        policy_kernel,
        out_shape=jax.ShapeDtypeStruct((2, B_pad), jnp.float32),
        grid=(n_tiles,),
        in_specs=[
            pl.BlockSpec((4, batch_tile), lambda i: (0, i)),     # x tile (lane-dense)
            rep(w1), rep(b1c),
            rep(w2), rep(b2c),
            rep(w3d), rep(b3d),
        ],
        out_specs=pl.BlockSpec((2, batch_tile), lambda i: (0, i)),  # lane-dense output
        compiler_params=pltpu.CompilerParams(
            dimension_semantics=("parallel",)),
    )(xt, w1, b1c, w2, b2c, w3d, b3d)

    return out_t[:, :B].T                                        # (B, 2)


def init_params(key):
    """Deterministic init mirroring torch.nn.Linear: U(-1/sqrt(fan_in), 1/sqrt(fan_in)).
    Torch layout: weight (out_features, in_features), bias (out_features,)."""
    dims = [(4, 64), (64, 32), (32, 2)]
    params = []
    for fan_in, fan_out in dims:
        key, kw, kb = jax.random.split(key, 3)
        bound = 1.0 / jnp.sqrt(jnp.float32(fan_in))
        w = jax.random.uniform(kw, (fan_out, fan_in), jnp.float32, -bound, bound)
        b = jax.random.uniform(kb, (fan_out,), jnp.float32, -bound, bound)
        params += [w, b]
    return tuple(params)


def policy_ref(x, params):
    """Pure-JAX reference (matches the PyTorch forward exactly)."""
    w1, b1, w2, b2, w3, b3 = params
    h1 = _leaky_relu(x @ w1.T + b1)
    h2 = _leaky_relu(h1 @ w2.T + b2)
    logits = h2 @ w3.T + b3
    return jax.nn.softmax(logits, axis=-1)


if __name__ == "__main__":
    key = jax.random.PRNGKey(0)
    kx, kp = jax.random.split(key)

    B = 8  # CartPole-style batch: 4 features per observation, 2 actions
    x = jax.random.normal(kx, (B, 4), dtype=jnp.float32)
    params = init_params(kp)

    probs = policy_forward(x, params)
    probs = jax.block_until_ready(probs)

    ref = policy_ref(x, params)
    assert probs.shape == (B, 2)
    assert jnp.allclose(jnp.sum(probs, axis=-1), 1.0, atol=1e-5)
    assert jnp.allclose(probs, ref, atol=1e-5, rtol=1e-5)

    print("KERNEL_OK")
</pallas_src>

<mosaic_0001>
module attributes {stable_mosaic.version = 11 : i64} {
  func.func @policy_kernel(%arg0: i32, %arg1: memref<4x512xf32, #tpu.memory_space<vmem>>, %arg2: memref<64x4xf32, #tpu.memory_space<vmem>>, %arg3: memref<64x1xf32, #tpu.memory_space<vmem>>, %arg4: memref<32x64xf32, #tpu.memory_space<vmem>>, %arg5: memref<32x1xf32, #tpu.memory_space<vmem>>, %arg6: memref<1x32xf32, #tpu.memory_space<vmem>>, %arg7: memref<1x1xf32, #tpu.memory_space<vmem>>, %arg8: memref<2x512xf32, #tpu.memory_space<vmem>>) attributes {dimension_semantics = [#tpu.dimension_semantics<parallel>], iteration_bounds = array<i64: 1>, scalar_prefetch = 0 : i64, scratch_operands = 0 : i64, tpu.core_type = #tpu.core_type<tc>, window_params = [{transform_indices = @transform_0, window_bounds = array<i64: 4, 512>}, {pipeline_mode = #tpu.pipeline_mode<synchronous>, transform_indices = @transform_1, window_bounds = array<i64: 64, 4>}, {pipeline_mode = #tpu.pipeline_mode<synchronous>, transform_indices = @transform_2, window_bounds = array<i64: 64, 1>}, {pipeline_mode = #tpu.pipeline_mode<synchronous>, transform_indices = @transform_3, window_bounds = array<i64: 32, 64>}, {pipeline_mode = #tpu.pipeline_mode<synchronous>, transform_indices = @transform_4, window_bounds = array<i64: 32, 1>}, {pipeline_mode = #tpu.pipeline_mode<synchronous>, transform_indices = @transform_5, window_bounds = array<i64: 1, 32>}, {pipeline_mode = #tpu.pipeline_mode<synchronous>, transform_indices = @transform_6, window_bounds = array<i64: 1, 1>}, {transform_indices = @transform_7, window_bounds = array<i64: 2, 512>}]} {
    %c0 = arith.constant 0 : index
    %c0_0 = arith.constant 0 : index
    %0 = vector.load %arg1[%c0, %c0_0] : memref<4x512xf32, #tpu.memory_space<vmem>>, vector<4x512xf32>
    %c0_1 = arith.constant 0 : index
    %c0_2 = arith.constant 0 : index
    %1 = vector.load %arg2[%c0_1, %c0_2] : memref<64x4xf32, #tpu.memory_space<vmem>>, vector<64x4xf32>
    %c0_3 = arith.constant 0 : index
    %c0_4 = arith.constant 0 : index
    %2 = vector.load %arg3[%c0_3, %c0_4] : memref<64x1xf32, #tpu.memory_space<vmem>>, vector<64x1xf32>
    %3 = vector.extract_strided_slice %1 {offsets = [0, 0], sizes = [64, 1], strides = [1, 1]} : vector<64x4xf32> to vector<64x1xf32>
    %4 = vector.extract_strided_slice %0 {offsets = [0, 0], sizes = [1, 512], strides = [1, 1]} : vector<4x512xf32> to vector<1x512xf32>
    %5 = vector.broadcast %3 : vector<64x1xf32> to vector<64x512xf32>
    %6 = vector.broadcast %4 : vector<1x512xf32> to vector<64x512xf32>
    %7 = arith.mulf %5, %6 : vector<64x512xf32>
    %8 = vector.broadcast %2 : vector<64x1xf32> to vector<64x512xf32>
    %9 = arith.addf %8, %7 : vector<64x512xf32>
    %10 = vector.extract_strided_slice %1 {offsets = [0, 1], sizes = [64, 1], strides = [1, 1]} : vector<64x4xf32> to vector<64x1xf32>
    %11 = vector.extract_strided_slice %0 {offsets = [1, 0], sizes = [1, 512], strides = [1, 1]} : vector<4x512xf32> to vector<1x512xf32>
    %12 = vector.broadcast %10 : vector<64x1xf32> to vector<64x512xf32>
    %13 = vector.broadcast %11 : vector<1x512xf32> to vector<64x512xf32>
    %14 = arith.mulf %12, %13 : vector<64x512xf32>
    %15 = arith.addf %9, %14 : vector<64x512xf32>
    %16 = vector.extract_strided_slice %1 {offsets = [0, 2], sizes = [64, 1], strides = [1, 1]} : vector<64x4xf32> to vector<64x1xf32>
    %17 = vector.extract_strided_slice %0 {offsets = [2, 0], sizes = [1, 512], strides = [1, 1]} : vector<4x512xf32> to vector<1x512xf32>
    %18 = vector.broadcast %16 : vector<64x1xf32> to vector<64x512xf32>
    %19 = vector.broadcast %17 : vector<1x512xf32> to vector<64x512xf32>
    %20 = arith.mulf %18, %19 : vector<64x512xf32>
    %21 = arith.addf %15, %20 : vector<64x512xf32>
    %22 = vector.extract_strided_slice %1 {offsets = [0, 3], sizes = [64, 1], strides = [1, 1]} : vector<64x4xf32> to vector<64x1xf32>
    %23 = vector.extract_strided_slice %0 {offsets = [3, 0], sizes = [1, 512], strides = [1, 1]} : vector<4x512xf32> to vector<1x512xf32>
    %24 = vector.broadcast %22 : vector<64x1xf32> to vector<64x512xf32>
    %25 = vector.broadcast %23 : vector<1x512xf32> to vector<64x512xf32>
    %26 = arith.mulf %24, %25 : vector<64x512xf32>
    %27 = arith.addf %21, %26 : vector<64x512xf32>
    %cst = arith.constant 0.000000e+00 : f32
    %28 = vector.broadcast %cst : f32 to vector<64x512xf32>
    %29 = arith.cmpf ogt, %27, %28 : vector<64x512xf32>
    %cst_5 = arith.constant 0.00999999977 : f32
    %30 = vector.broadcast %cst_5 : f32 to vector<64x512xf32>
    %31 = arith.mulf %30, %27 : vector<64x512xf32>
    %32 = arith.select %29, %27, %31 : vector<64x512xi1>, vector<64x512xf32>
    %c0_6 = arith.constant 0 : index
    %c0_7 = arith.constant 0 : index
    %33 = vector.load %arg4[%c0_6, %c0_7] : memref<32x64xf32, #tpu.memory_space<vmem>>, vector<32x64xf32>
    %cst_8 = arith.constant dense<0.000000e+00> : vector<32x512xf32>
    %34 = tpu.matmul %33, %32, %cst_8 {dimension_numbers = #tpu.dot_dimension_numbers<[1], [0], [0], [1], [0, 0, 1, 1], [], []>} : vector<32x64xf32>, vector<64x512xf32>, vector<32x512xf32> -> vector<32x512xf32>
    %c0_9 = arith.constant 0 : index
    %c0_10 = arith.constant 0 : index
    %35 = vector.load %arg5[%c0_9, %c0_10] : memref<32x1xf32, #tpu.memory_space<vmem>>, vector<32x1xf32>
    %36 = vector.broadcast %35 : vector<32x1xf32> to vector<32x512xf32>
    %37 = arith.addf %34, %36 : vector<32x512xf32>
    %cst_11 = arith.constant 0.000000e+00 : f32
    %38 = vector.broadcast %cst_11 : f32 to vector<32x512xf32>
    %39 = arith.cmpf ogt, %37, %38 : vector<32x512xf32>
    %cst_12 = arith.constant 0.00999999977 : f32
    %40 = vector.broadcast %cst_12 : f32 to vector<32x512xf32>
    %41 = arith.mulf %40, %37 : vector<32x512xf32>
    %42 = arith.select %39, %37, %41 : vector<32x512xi1>, vector<32x512xf32>
    %c0_13 = arith.constant 0 : index
    %c0_14 = arith.constant 0 : index
    %43 = vector.load %arg6[%c0_13, %c0_14] : memref<1x32xf32, #tpu.memory_space<vmem>>, vector<1x32xf32>
    %cst_15 = arith.constant dense<0.000000e+00> : vector<1x512xf32>
    %44 = tpu.matmul %43, %42, %cst_15 {dimension_numbers = #tpu.dot_dimension_numbers<[1], [0], [0], [1], [0, 0, 1, 1], [], []>} : vector<1x32xf32>, vector<32x512xf32>, vector<1x512xf32> -> vector<1x512xf32>
    %c0_16 = arith.constant 0 : index
    %c0_17 = arith.constant 0 : index
    %45 = vector.load %arg7[%c0_16, %c0_17] : memref<1x1xf32, #tpu.memory_space<vmem>>, vector<1x1xf32>
    %46 = vector.broadcast %45 : vector<1x1xf32> to vector<1x512xf32>
    %47 = arith.addf %44, %46 : vector<1x512xf32>
    %cst_18 = arith.constant 0.000000e+00 : f32
    %48 = vector.broadcast %cst_18 : f32 to vector<1x512xf32>
    %49 = arith.subf %48, %47 : vector<1x512xf32>
    %50 = math.exp %49 : vector<1x512xf32>
    %cst_19 = arith.constant 1.000000e+00 : f32
    %51 = vector.broadcast %cst_19 : f32 to vector<1x512xf32>
    %52 = arith.addf %51, %50 : vector<1x512xf32>
    %cst_20 = arith.constant 1.000000e+00 : f32
    %53 = vector.broadcast %cst_20 : f32 to vector<1x512xf32>
    %54 = arith.divf %53, %52 : vector<1x512xf32>
    %cst_21 = arith.constant 1.000000e+00 : f32
    %55 = vector.broadcast %cst_21 : f32 to vector<1x512xf32>
    %56 = arith.subf %55, %54 : vector<1x512xf32>
    %57 = tpu.concatenate %54, %56 in 0 : vector<1x512xf32>, vector<1x512xf32> -> vector<2x512xf32>
    %c0_22 = arith.constant 0 : index
    %c0_23 = arith.constant 0 : index
    %58 = vector.load %arg8[%c0_22, %c0_23] : memref<2x512xf32, #tpu.memory_space<vmem>>, vector<2x512xf32>
    tpu.vector_store %arg8[%c0_22, %c0_23], %57 {strides = array<i32>} : memref<2x512xf32, #tpu.memory_space<vmem>>, vector<2x512xf32>,
    return
  }
  func.func @transform_0(%arg0: i32) -> (i32, i32) {
    %c0_i32 = arith.constant 0 : i32
    %c0_i32_0 = arith.constant 0 : i32
    return %c0_i32, %arg0 : i32, i32
  }
  func.func @transform_1(%arg0: i32) -> (i32, i32) {
    %c0_i32 = arith.constant 0 : i32
    %c0_i32_0 = arith.constant 0 : i32
    %c0_i32_1 = arith.constant 0 : i32
    return %c0_i32, %c0_i32_0 : i32, i32
  }
  func.func @transform_2(%arg0: i32) -> (i32, i32) {
    %c0_i32 = arith.constant 0 : i32
    %c0_i32_0 = arith.constant 0 : i32
    %c0_i32_1 = arith.constant 0 : i32
    return %c0_i32, %c0_i32_0 : i32, i32
  }
  func.func @transform_3(%arg0: i32) -> (i32, i32) {
    %c0_i32 = arith.constant 0 : i32
    %c0_i32_0 = arith.constant 0 : i32
    %c0_i32_1 = arith.constant 0 : i32
    return %c0_i32, %c0_i32_0 : i32, i32
  }
  func.func @transform_4(%arg0: i32) -> (i32, i32) {
    %c0_i32 = arith.constant 0 : i32
    %c0_i32_0 = arith.constant 0 : i32
    %c0_i32_1 = arith.constant 0 : i32
    return %c0_i32, %c0_i32_0 : i32, i32
  }
  func.func @transform_5(%arg0: i32) -> (i32, i32) {
    %c0_i32 = arith.constant 0 : i32
    %c0_i32_0 = arith.constant 0 : i32
    %c0_i32_1 = arith.constant 0 : i32
    return %c0_i32, %c0_i32_0 : i32, i32
  }
  func.func @transform_6(%arg0: i32) -> (i32, i32) {
    %c0_i32 = arith.constant 0 : i32
    %c0_i32_0 = arith.constant 0 : i32
    %c0_i32_1 = arith.constant 0 : i32
    return %c0_i32, %c0_i32_0 : i32, i32
  }
  func.func @transform_7(%arg0: i32) -> (i32, i32) {
    %c0_i32 = arith.constant 0 : i32
    %c0_i32_0 = arith.constant 0 : i32
    return %c0_i32, %arg0 : i32, i32
  }
}

</mosaic_0001>

<llo_original>
// kernel: tpu_custom_call.1
$region0: #{tpu_custom_call.1}
  #allocation0 [shape = 'u32[]', space=smem, size = 0x4, offset = 0x4, fixed_abs, tag = 'smem constant byte address 0x4 - core index']
  #allocation1 [shape = 'u32[144,128]{1,0:T(1,128)}', space=vmem, size = 0x12000, scoped, tag = 'internal scratch']
  #allocation2 [shape = 'f32[1,1]{1,0:T(1,128)S(1)}', space=vmem, size = 0x200, scoped, tag = 'scoped memory for tpu_custom_call.1']
  %s0 = inlined_call_operand.vmem [shape: f32[4,512], index: 0, kind: input, shape index: {}]
  %s1 = inlined_call_operand.vmem [shape: f32[64,4], index: 1, kind: input, shape index: {}]
  %s2 = inlined_call_operand.vmem [shape: f32[64,1], index: 2, kind: input, shape index: {}]
  %s3 = inlined_call_operand.vmem [shape: f32[32,64], index: 3, kind: input, shape index: {}]
  %s4 = inlined_call_operand.vmem [shape: f32[32,1], index: 4, kind: input, shape index: {}]
  %s5 = inlined_call_operand.vmem [shape: f32[1,32], index: 5, kind: input, shape index: {}]
  %s6 = inlined_call_operand.<no memory space> [shape: f32[1,1], index: 6, kind: input, shape index: {}]
  %s7 = inlined_call_operand.hbm [shape: f32[2,512], index: 7, kind: output, shape index: {}]
  %s8 = sld [smem:[#allocation0]]
  $region38: #{tpu_custom_call.1} parent=0
    _
  %s10 = ssub.s32 1, %s8
  %s11 = scalar_select 0, %s10, %s8
  %v12 = vstv %s6
  %13 = vst [vmem:[#allocation2] sm:$0x1] %v12
  $region1: #{tpu_custom_call.1} parent=0
    #allocation3 [shape = 'u8[4096]{0}', space=vmem, size = 0x1000, scoped, tag = 'output window, operand 0, single buffered']
    #allocation4 [shape = 's32[1]{0}', space=sflag, size = 0x4, scoped, tag = 'scoped memory for tpu_custom_call.1']
    %14 = vsyncpa [#allocation4], 0
    // Predicated region
    $region2: #{tpu_custom_call.1} parent=1 // pred_check
      _
    $region3: #{tpu_custom_call.1} parent=1 // pred_check_branch
      %16 = sbr.rel (0) target = $region5
    $region4: #{tpu_custom_call.1} parent=1 // pred_region
      _
    $region5: #{tpu_custom_call.1} parent=1 // pred_fallthru
      _
    // Predicated region
    $region6: #{tpu_custom_call.1} parent=1 // pred_check
      _
    $region7: #{tpu_custom_call.1} parent=1 // pred_check_branch
      %18 = sbr.rel (0) target = $region9
    $region8: #{tpu_custom_call.1} parent=1 // pred_region
      _
    $region9: #{tpu_custom_call.1} parent=1 // pred_fallthru
      _
    // Predicated region
    $region10: #{tpu_custom_call.1} parent=1 // pred_check
      _
    $region11: #{tpu_custom_call.1} parent=1 // pred_check_branch
      %20 = sbr.rel (0) target = $region13
    $region12: #{tpu_custom_call.1} parent=1 // pred_region
      _
    $region13: #{tpu_custom_call.1} parent=1 // pred_fallthru
      _
    // Predicated region
    $region14: #{tpu_custom_call.1} parent=1 // pred_check
      _
    $region15: #{tpu_custom_call.1} parent=1 // pred_check_branch
      %22 = sbr.rel (0) target = $region17
    $region16: #{tpu_custom_call.1} parent=1 // pred_region
      _
    $region17: #{tpu_custom_call.1} parent=1 // pred_fallthru
      _
    // Predicated region
    $region18: #{tpu_custom_call.1} parent=1 // pred_check
      _
    $region19: #{tpu_custom_call.1} parent=1 // pred_check_branch
      %24 = sbr.rel (0) target = $region21
    $region20: #{tpu_custom_call.1} parent=1 // pred_region
      _
    $region21: #{tpu_custom_call.1} parent=1 // pred_fallthru
      _
    // Predicated region
    $region22: #{tpu_custom_call.1} parent=1 // pred_check
      _
    $region23: #{tpu_custom_call.1} parent=1 // pred_check_branch
      %26 = sbr.rel (0) target = $region25
    $region24: #{tpu_custom_call.1} parent=1 // pred_region
      _
    $region25: #{tpu_custom_call.1} parent=1 // pred_fallthru
      _
    // Predicated region
    $region26: #{tpu_custom_call.1} parent=1 // pred_check
      _
    $region27: #{tpu_custom_call.1} parent=1 // pred_check_branch
      %28 = sbr.rel (0) target = $region29
    $region28: #{tpu_custom_call.1} parent=1 // pred_region
      _
    $region29: #{tpu_custom_call.1} parent=1 // pred_fallthru
      _
    %v29 = vld [vmem:[%s0] sm:$0xff]
    %v30 = vld [vmem:[%s0 + $0x8] sm:$0xff]
    %v31 = vld [vmem:[%s1] sm:$0xff]
    %v32 = vld [vmem:[%s1 + $0x8] sm:$0xff]
    %v33 = vld [vmem:[%s1 + $0x10] sm:$0xff]
    %v34 = vld [vmem:[%s1 + $0x18] sm:$0xff]
    %v35 = vld [vmem:[%s1 + $0x20] sm:$0xff]
    %v36 = vld [vmem:[%s1 + $0x28] sm:$0xff]
    %v37 = vld [vmem:[%s1 + $0x30] sm:$0xff]
    %v38 = vld [vmem:[%s1 + $0x38] sm:$0xff]
    %v39 = vld [vmem:[%s2] sm:$0xff]
    %v40 = vld [vmem:[%s2 + $0x8] sm:$0xff]
    %v41 = vld [vmem:[%s2 + $0x10] sm:$0xff]
    %v42 = vld [vmem:[%s2 + $0x18] sm:$0xff]
    %v43 = vld [vmem:[%s2 + $0x20] sm:$0xff]
    %v44 = vld [vmem:[%s2 + $0x28] sm:$0xff]
    %v45 = vld [vmem:[%s2 + $0x30] sm:$0xff]
    %v46 = vld [vmem:[%s2 + $0x38] sm:$0xff]
    %48 = vset.pattern.permute.xlu0 0
    %49 = vperm.xlu0 %48, %v31
    %v50 = vpop.permute.xlu0 %49
    %53 = vset.pattern.permute.xlu0 0
    %54 = vperm.xlu0 %53, %v32
    %v55 = vpop.permute.xlu0 %54
    %58 = vset.pattern.permute.xlu0 0
    %59 = vperm.xlu0 %58, %v33
    %v60 = vpop.permute.xlu0 %59
    %63 = vset.pattern.permute.xlu0 0
    %64 = vperm.xlu0 %63, %v34
    %v65 = vpop.permute.xlu0 %64
    %68 = vset.pattern.permute.xlu0 0
    %69 = vperm.xlu0 %68, %v35
    %v70 = vpop.permute.xlu0 %69
    %73 = vset.pattern.permute.xlu0 0
    %74 = vperm.xlu0 %73, %v36
    %v75 = vpop.permute.xlu0 %74
    %78 = vset.pattern.permute.xlu0 0
    %79 = vperm.xlu0 %78, %v37
    %v80 = vpop.permute.xlu0 %79
    %83 = vset.pattern.permute.xlu0 0
    %84 = vperm.xlu0 %83, %v38
    %v85 = vpop.permute.xlu0 %84
    %v89 = vlaneseq
    %v90 = vshrl.u32 %v89, 7
    %v91 = vsub.s32 0, %v90
    %v92 = vrot.slane %v29, %v91
    %v93 = vlaneseq
    %v94 = vshrl.u32 %v93, 7
    %v95 = vsub.s32 4, %v94
    %v96 = vrot.slane %v29, %v95
    %v97 = vlaneseq
    %v98 = vshrl.u32 %v97, 7
    %v99 = vsub.s32 0, %v98
    %v100 = vrot.slane %v30, %v99
    %v101 = vlaneseq
    %v102 = vshrl.u32 %v101, 7
    %v103 = vsub.s32 4, %v102
    %v104 = vrot.slane %v30, %v103
    %v109 = vlaneseq
    %v110 = vshrl.u32 %v109, 7
    %v111 = vsub.s32 0, %v110
    %v112 = vrot.slane %v92, %v111
    %v113 = vlaneseq
    %v114 = vshrl.u32 %v113, 7
    %v115 = vsub.s32 0, %v114
    %v116 = vrot.slane %v96, %v115
    %v117 = vlaneseq
    %v118 = vshrl.u32 %v117, 7
    %v119 = vsub.s32 0, %v118
    %v120 = vrot.slane %v100, %v119
    %v121 = vlaneseq
    %v122 = vshrl.u32 %v121, 7
    %v123 = vsub.s32 0, %v122
    %v124 = vrot.slane %v104, %v123
    %v125 = vmul.f32 %v50, %v112
    %v126 = vmul.f32 %v50, %v116
    %v127 = vmul.f32 %v50, %v120
    %v128 = vmul.f32 %v50, %v124
    %v129 = vmul.f32 %v55, %v112
    %v130 = vmul.f32 %v55, %v116
    %v131 = vmul.f32 %v55, %v120
    %v132 = vmul.f32 %v55, %v124
    %v133 = vmul.f32 %v60, %v112
    %v134 = vmul.f32 %v60, %v116
    %v135 = vmul.f32 %v60, %v120
    %v136 = vmul.f32 %v60, %v124
    %v137 = vmul.f32 %v65, %v112
    %v138 = vmul.f32 %v65, %v116
    %v139 = vmul.f32 %v65, %v120
    %v140 = vmul.f32 %v65, %v124
    %v141 = vmul.f32 %v70, %v112
    %v142 = vmul.f32 %v70, %v116
    %v143 = vmul.f32 %v70, %v120
    %v144 = vmul.f32 %v70, %v124
    %v145 = vmul.f32 %v75, %v112
    %v146 = vmul.f32 %v75, %v116
    %v147 = vmul.f32 %v75, %v120
    %v148 = vmul.f32 %v75, %v124
    %v149 = vmul.f32 %v80, %v112
    %v150 = vmul.f32 %v80, %v116
    %v151 = vmul.f32 %v80, %v120
    %v152 = vmul.f32 %v80, %v124
    %v153 = vmul.f32 %v85, %v112
    %v154 = vmul.f32 %v85, %v116
    %v155 = vmul.f32 %v85, %v120
    %v156 = vmul.f32 %v85, %v124
    %158 = vset.pattern.permute.xlu0 0
    %159 = vperm.xlu0 %158, %v39
    %v160 = vpop.permute.xlu0 %159
    %163 = vset.pattern.permute.xlu0 0
    %164 = vperm.xlu0 %163, %v40
    %v165 = vpop.permute.xlu0 %164
    %168 = vset.pattern.permute.xlu0 0
    %169 = vperm.xlu0 %168, %v41
    %v170 = vpop.permute.xlu0 %169
    %173 = vset.pattern.permute.xlu0 0
    %174 = vperm.xlu0 %173, %v42
    %v175 = vpop.permute.xlu0 %174
    %178 = vset.pattern.permute.xlu0 0
    %179 = vperm.xlu0 %178, %v43
    %v180 = vpop.permute.xlu0 %179
    %183 = vset.pattern.permute.xlu0 0
    %184 = vperm.xlu0 %183, %v44
    %v185 = vpop.permute.xlu0 %184
    %188 = vset.pattern.permute.xlu0 0
    %189 = vperm.xlu0 %188, %v45
    %v190 = vpop.permute.xlu0 %189
    %193 = vset.pattern.permute.xlu0 0
    %194 = vperm.xlu0 %193, %v46
    %v195 = vpop.permute.xlu0 %194
    %v197 = vadd.f32 %v160, %v125
    %v198 = vadd.f32 %v160, %v126
    %v199 = vadd.f32 %v160, %v127
    %v200 = vadd.f32 %v160, %v128
    %v201 = vadd.f32 %v165, %v129
    %v202 = vadd.f32 %v165, %v130
    %v203 = vadd.f32 %v165, %v131
    %v204 = vadd.f32 %v165, %v132
    %v205 = vadd.f32 %v170, %v133
    %v206 = vadd.f32 %v170, %v134
    %v207 = vadd.f32 %v170, %v135
    %v208 = vadd.f32 %v170, %v136
    %v209 = vadd.f32 %v175, %v137
    %v210 = vadd.f32 %v175, %v138
    %v211 = vadd.f32 %v175, %v139
    %v212 = vadd.f32 %v175, %v140
    %v213 = vadd.f32 %v180, %v141
    %v214 = vadd.f32 %v180, %v142
    %v215 = vadd.f32 %v180, %v143
    %v216 = vadd.f32 %v180, %v144
    %v217 = vadd.f32 %v185, %v145
    %v218 = vadd.f32 %v185, %v146
    %v219 = vadd.f32 %v185, %v147
    %v220 = vadd.f32 %v185, %v148
    %v221 = vadd.f32 %v190, %v149
    %v222 = vadd.f32 %v190, %v150
    %v223 = vadd.f32 %v190, %v151
    %v224 = vadd.f32 %v190, %v152
    %v225 = vadd.f32 %v195, %v153
    %v226 = vadd.f32 %v195, %v154
    %v227 = vadd.f32 %v195, %v155
    %v228 = vadd.f32 %v195, %v156
    %229 = vset.pattern.permute.xlu0 1
    %230 = vperm.xlu0 %229, %v31
    %v231 = vpop.permute.xlu0 %230
    %233 = vset.pattern.permute.xlu0 1
    %234 = vperm.xlu0 %233, %v32
    %v235 = vpop.permute.xlu0 %234
    %237 = vset.pattern.permute.xlu0 1
    %238 = vperm.xlu0 %237, %v33
    %v239 = vpop.permute.xlu0 %238
    %241 = vset.pattern.permute.xlu0 1
    %242 = vperm.xlu0 %241, %v34
    %v243 = vpop.permute.xlu0 %242
    %245 = vset.pattern.permute.xlu0 1
    %246 = vperm.xlu0 %245, %v35
    %v247 = vpop.permute.xlu0 %246
    %249 = vset.pattern.permute.xlu0 1
    %250 = vperm.xlu0 %249, %v36
    %v251 = vpop.permute.xlu0 %250
    %253 = vset.pattern.permute.xlu0 1
    %254 = vperm.xlu0 %253, %v37
    %v255 = vpop.permute.xlu0 %254
    %257 = vset.pattern.permute.xlu0 1
    %258 = vperm.xlu0 %257, %v38
    %v259 = vpop.permute.xlu0 %258
    %v261 = vlaneseq
    %v262 = vshrl.u32 %v261, 7
    %v263 = vsub.s32 1, %v262
    %v264 = vrot.slane %v29, %v263
    %v265 = vlaneseq
    %v266 = vshrl.u32 %v265, 7
    %v267 = vsub.s32 5, %v266
    %v268 = vrot.slane %v29, %v267
    %v269 = vlaneseq
    %v270 = vshrl.u32 %v269, 7
    %v271 = vsub.s32 1, %v270
    %v272 = vrot.slane %v30, %v271
    %v273 = vlaneseq
    %v274 = vshrl.u32 %v273, 7
    %v275 = vsub.s32 5, %v274
    %v276 = vrot.slane %v30, %v275
    %v281 = vlaneseq
    %v282 = vshrl.u32 %v281, 7
    %v283 = vsub.s32 1, %v282
    %v284 = vrot.slane %v264, %v283
    %v285 = vlaneseq
    %v286 = vshrl.u32 %v285, 7
    %v287 = vsub.s32 1, %v286
    %v288 = vrot.slane %v268, %v287
    %v289 = vlaneseq
    %v290 = vshrl.u32 %v289, 7
    %v291 = vsub.s32 1, %v290
    %v292 = vrot.slane %v272, %v291
    %v293 = vlaneseq
    %v294 = vshrl.u32 %v293, 7
    %v295 = vsub.s32 1, %v294
    %v296 = vrot.slane %v276, %v295
    %v297 = vmul.f32 %v231, %v284
    %v298 = vmul.f32 %v231, %v288
    %v299 = vmul.f32 %v231, %v292
    %v300 = vmul.f32 %v231, %v296
    %v301 = vmul.f32 %v235, %v284
    %v302 = vmul.f32 %v235, %v288
    %v303 = vmul.f32 %v235, %v292
    %v304 = vmul.f32 %v235, %v296
    %v305 = vmul.f32 %v239, %v284
    %v306 = vmul.f32 %v239, %v288
    %v307 = vmul.f32 %v239, %v292
    %v308 = vmul.f32 %v239, %v296
    %v309 = vmul.f32 %v243, %v284
    %v310 = vmul.f32 %v243, %v288
    %v311 = vmul.f32 %v243, %v292
    %v312 = vmul.f32 %v243, %v296
    %v313 = vmul.f32 %v247, %v284
    %v314 = vmul.f32 %v247, %v288
    %v315 = vmul.f32 %v247, %v292
    %v316 = vmul.f32 %v247, %v296
    %v317 = vmul.f32 %v251, %v284
    %v318 = vmul.f32 %v251, %v288
    %v319 = vmul.f32 %v251, %v292
    %v320 = vmul.f32 %v251, %v296
    %v321 = vmul.f32 %v255, %v284
    %v322 = vmul.f32 %v255, %v288
    %v323 = vmul.f32 %v255, %v292
    %v324 = vmul.f32 %v255, %v296
    %v325 = vmul.f32 %v259, %v284
    %v326 = vmul.f32 %v259, %v288
    %v327 = vmul.f32 %v259, %v292
    %v328 = vmul.f32 %v259, %v296
    %v329 = vadd.f32 %v197, %v297
    %v330 = vadd.f32 %v198, %v298
    %v331 = vadd.f32 %v199, %v299
    %v332 = vadd.f32 %v200, %v300
    %v333 = vadd.f32 %v201, %v301
    %v334 = vadd.f32 %v202, %v302
    %v335 = vadd.f32 %v203, %v303
    %v336 = vadd.f32 %v204, %v304
    %v337 = vadd.f32 %v205, %v305
    %v338 = vadd.f32 %v206, %v306
    %v339 = vadd.f32 %v207, %v307
    %v340 = vadd.f32 %v208, %v308
    %v341 = vadd.f32 %v209, %v309
    %v342 = vadd.f32 %v210, %v310
    %v343 = vadd.f32 %v211, %v311
    %v344 = vadd.f32 %v212, %v312
    %v345 = vadd.f32 %v213, %v313
    %v346 = vadd.f32 %v214, %v314
    %v347 = vadd.f32 %v215, %v315
    %v348 = vadd.f32 %v216, %v316
    %v349 = vadd.f32 %v217, %v317
    %v350 = vadd.f32 %v218, %v318
    %v351 = vadd.f32 %v219, %v319
    %v352 = vadd.f32 %v220, %v320
    %v353 = vadd.f32 %v221, %v321
    %v354 = vadd.f32 %v222, %v322
    %v355 = vadd.f32 %v223, %v323
    %v356 = vadd.f32 %v224, %v324
    %v357 = vadd.f32 %v225, %v325
    %v358 = vadd.f32 %v226, %v326
    %v359 = vadd.f32 %v227, %v327
    %v360 = vadd.f32 %v228, %v328
    %361 = vset.pattern.permute.xlu0 2
    %362 = vperm.xlu0 %361, %v31
    %v363 = vpop.permute.xlu0 %362
    %365 = vset.pattern.permute.xlu0 2
    %366 = vperm.xlu0 %365, %v32
    %v367 = vpop.permute.xlu0 %366
    %369 = vset.pattern.permute.xlu0 2
    %370 = vperm.xlu0 %369, %v33
    %v371 = vpop.permute.xlu0 %370
    %373 = vset.pattern.permute.xlu0 2
    %374 = vperm.xlu0 %373, %v34
    %v375 = vpop.permute.xlu0 %374
    %377 = vset.pattern.permute.xlu0 2
    %378 = vperm.xlu0 %377, %v35
    %v379 = vpop.permute.xlu0 %378
    %381 = vset.pattern.permute.xlu0 2
    %382 = vperm.xlu0 %381, %v36
    %v383 = vpop.permute.xlu0 %382
    %385 = vset.pattern.permute.xlu0 2
    %386 = vperm.xlu0 %385, %v37
    %v387 = vpop.permute.xlu0 %386
    %389 = vset.pattern.permute.xlu0 2
    %390 = vperm.xlu0 %389, %v38
    %v391 = vpop.permute.xlu0 %390
    %v393 = vlaneseq
    %v394 = vshrl.u32 %v393, 7
    %v395 = vsub.s32 2, %v394
    %v396 = vrot.slane %v29, %v395
    %v397 = vlaneseq
    %v398 = vshrl.u32 %v397, 7
    %v399 = vsub.s32 6, %v398
    %v400 = vrot.slane %v29, %v399
    %v401 = vlaneseq
    %v402 = vshrl.u32 %v401, 7
    %v403 = vsub.s32 2, %v402
    %v404 = vrot.slane %v30, %v403
    %v405 = vlaneseq
    %v406 = vshrl.u32 %v405, 7
    %v407 = vsub.s32 6, %v406
    %v408 = vrot.slane %v30, %v407
    %v413 = vlaneseq
    %v414 = vshrl.u32 %v413, 7
    %v415 = vsub.s32 2, %v414
    %v416 = vrot.slane %v396, %v415
    %v417 = vlaneseq
    %v418 = vshrl.u32 %v417, 7
    %v419 = vsub.s32 2, %v418
    %v420 = vrot.slane %v400, %v419
    %v421 = vlaneseq
    %v422 = vshrl.u32 %v421, 7
    %v423 = vsub.s32 2, %v422
    %v424 = vrot.slane %v404, %v423
    %v425 = vlaneseq
    %v426 = vshrl.u32 %v425, 7
    %v427 = vsub.s32 2, %v426
    %v428 = vrot.slane %v408, %v427
    %v429 = vmul.f32 %v363, %v416
    %v430 = vmul.f32 %v363, %v420
    %v431 = vmul.f32 %v363, %v424
    %v432 = vmul.f32 %v363, %v428
    %v433 = vmul.f32 %v367, %v416
    %v434 = vmul.f32 %v367, %v420
    %v435 = vmul.f32 %v367, %v424
    %v436 = vmul.f32 %v367, %v428
    %v437 = vmul.f32 %v371, %v416
    %v438 = vmul.f32 %v371, %v420
    %v439 = vmul.f32 %v371, %v424
    %v440 = vmul.f32 %v371, %v428
    %v441 = vmul.f32 %v375, %v416
    %v442 = vmul.f32 %v375, %v420
    %v443 = vmul.f32 %v375, %v424
    %v444 = vmul.f32 %v375, %v428
    %v445 = vmul.f32 %v379, %v416
    %v446 = vmul.f32 %v379, %v420
    %v447 = vmul.f32 %v379, %v424
    %v448 = vmul.f32 %v379, %v428
    %v449 = vmul.f32 %v383, %v416
    %v450 = vmul.f32 %v383, %v420
    %v451 = vmul.f32 %v383, %v424
    %v452 = vmul.f32 %v383, %v428
    %v453 = vmul.f32 %v387, %v416
    %v454 = vmul.f32 %v387, %v420
    %v455 = vmul.f32 %v387, %v424
    %v456 = vmul.f32 %v387, %v428
    %v457 = vmul.f32 %v391, %v416
    %v458 = vmul.f32 %v391, %v420
    %v459 = vmul.f32 %v391, %v424
    %v460 = vmul.f32 %v391, %v428
    %v461 = vadd.f32 %v329, %v429
    %v462 = vadd.f32 %v330, %v430
    %v463 = vadd.f32 %v331, %v431
    %v464 = vadd.f32 %v332, %v432
    %v465 = vadd.f32 %v333, %v433
    %v466 = vadd.f32 %v334, %v434
    %v467 = vadd.f32 %v335, %v435
    %v468 = vadd.f32 %v336, %v436
    %v469 = vadd.f32 %v337, %v437
    %v470 = vadd.f32 %v338, %v438
    %v471 = vadd.f32 %v339, %v439
    %v472 = vadd.f32 %v340, %v440
    %v473 = vadd.f32 %v341, %v441
    %v474 = vadd.f32 %v342, %v442
    %v475 = vadd.f32 %v343, %v443
    %v476 = vadd.f32 %v344, %v444
    %v477 = vadd.f32 %v345, %v445
    %v478 = vadd.f32 %v346, %v446
    %v479 = vadd.f32 %v347, %v447
    %v480 = vadd.f32 %v348, %v448
    %v481 = vadd.f32 %v349, %v449
    %v482 = vadd.f32 %v350, %v450
    %v483 = vadd.f32 %v351, %v451
    %v484 = vadd.f32 %v352, %v452
    %v485 = vadd.f32 %v353, %v453
    %v486 = vadd.f32 %v354, %v454
    %v487 = vadd.f32 %v355, %v455
    %v488 = vadd.f32 %v356, %v456
    %v489 = vadd.f32 %v357, %v457
    %v490 = vadd.f32 %v358, %v458
    %v491 = vadd.f32 %v359, %v459
    %v492 = vadd.f32 %v360, %v460
    %493 = vset.pattern.permute.xlu0 3
    %494 = vperm.xlu0 %493, %v31
    %v495 = vpop.permute.xlu0 %494
    %497 = vset.pattern.permute.xlu0 3
    %498 = vperm.xlu0 %497, %v32
    %v499 = vpop.permute.xlu0 %498
    %501 = vset.pattern.permute.xlu0 3
    %502 = vperm.xlu0 %501, %v33
    %v503 = vpop.permute.xlu0 %502
    %505 = vset.pattern.permute.xlu0 3
    %506 = vperm.xlu0 %505, %v34
    %v507 = vpop.permute.xlu0 %506
    %509 = vset.pattern.permute.xlu0 3
    %510 = vperm.xlu0 %509, %v35
    %v511 = vpop.permute.xlu0 %510
    %513 = vset.pattern.permute.xlu0 3
    %514 = vperm.xlu0 %513, %v36
    %v515 = vpop.permute.xlu0 %514
    %517 = vset.pattern.permute.xlu0 3
    %518 = vperm.xlu0 %517, %v37
    %v519 = vpop.permute.xlu0 %518
    %521 = vset.pattern.permute.xlu0 3
    %522 = vperm.xlu0 %521, %v38
    %v523 = vpop.permute.xlu0 %522
    %v525 = vlaneseq
    %v526 = vshrl.u32 %v525, 7
    %v527 = vsub.s32 3, %v526
    %v528 = vrot.slane %v29, %v527
    %v529 = vlaneseq
    %v530 = vshrl.u32 %v529, 7
    %v531 = vsub.s32 7, %v530
    %v532 = vrot.slane %v29, %v531
    %v533 = vlaneseq
    %v534 = vshrl.u32 %v533, 7
    %v535 = vsub.s32 3, %v534
    %v536 = vrot.slane %v30, %v535
    %v537 = vlaneseq
    %v538 = vshrl.u32 %v537, 7
    %v539 = vsub.s32 7, %v538
    %v540 = vrot.slane %v30, %v539
    %v545 = vlaneseq
    %v546 = vshrl.u32 %v545, 7
    %v547 = vsub.s32 3, %v546
    %v548 = vrot.slane %v528, %v547
    %v549 = vlaneseq
    %v550 = vshrl.u32 %v549, 7
    %v551 = vsub.s32 3, %v550
    %v552 = vrot.slane %v532, %v551
    %v553 = vlaneseq
    %v554 = vshrl.u32 %v553, 7
    %v555 = vsub.s32 3, %v554
    %v556 = vrot.slane %v536, %v555
    %v557 = vlaneseq
    %v558 = vshrl.u32 %v557, 7
    %v559 = vsub.s32 3, %v558
    %v560 = vrot.slane %v540, %v559
    %v561 = vmul.f32 %v495, %v548
    %v562 = vmul.f32 %v495, %v552
    %v563 = vmul.f32 %v495, %v556
    %v564 = vmul.f32 %v495, %v560
    %v565 = vmul.f32 %v499, %v548
    %v566 = vmul.f32 %v499, %v552
    %v567 = vmul.f32 %v499, %v556
    %v568 = vmul.f32 %v499, %v560
    %v569 = vmul.f32 %v503, %v548
    %v570 = vmul.f32 %v503, %v552
    %v571 = vmul.f32 %v503, %v556
    %v572 = vmul.f32 %v503, %v560
    %v573 = vmul.f32 %v507, %v548
    %v574 = vmul.f32 %v507, %v552
    %v575 = vmul.f32 %v507, %v556
    %v576 = vmul.f32 %v507, %v560
    %v577 = vmul.f32 %v511, %v548
    %v578 = vmul.f32 %v511, %v552
    %v579 = vmul.f32 %v511, %v556
    %v580 = vmul.f32 %v511, %v560
    %v581 = vmul.f32 %v515, %v548
    %v582 = vmul.f32 %v515, %v552
    %v583 = vmul.f32 %v515, %v556
    %v584 = vmul.f32 %v515, %v560
    %v585 = vmul.f32 %v519, %v548
    %v586 = vmul.f32 %v519, %v552
    %v587 = vmul.f32 %v519, %v556
    %v588 = vmul.f32 %v519, %v560
    %v589 = vmul.f32 %v523, %v548
    %v590 = vmul.f32 %v523, %v552
    %v591 = vmul.f32 %v523, %v556
    %v592 = vmul.f32 %v523, %v560
    %v593 = vadd.f32 %v461, %v561
    %v594 = vadd.f32 %v462, %v562
    %v595 = vadd.f32 %v463, %v563
    %v596 = vadd.f32 %v464, %v564
    %v597 = vadd.f32 %v465, %v565
    %v598 = vadd.f32 %v466, %v566
    %v599 = vadd.f32 %v467, %v567
    %v600 = vadd.f32 %v468, %v568
    %v601 = vadd.f32 %v469, %v569
    %v602 = vadd.f32 %v470, %v570
    %v603 = vadd.f32 %v471, %v571
    %v604 = vadd.f32 %v472, %v572
    %v605 = vadd.f32 %v473, %v573
    %v606 = vadd.f32 %v474, %v574
    %v607 = vadd.f32 %v475, %v575
    %v608 = vadd.f32 %v476, %v576
    %v609 = vadd.f32 %v477, %v577
    %v610 = vadd.f32 %v478, %v578
    %v611 = vadd.f32 %v479, %v579
    %v612 = vadd.f32 %v480, %v580
    %v613 = vadd.f32 %v481, %v581
    %v614 = vadd.f32 %v482, %v582
    %v615 = vadd.f32 %v483, %v583
    %v616 = vadd.f32 %v484, %v584
    %v617 = vadd.f32 %v485, %v585
    %v618 = vadd.f32 %v486, %v586
    %v619 = vadd.f32 %v487, %v587
    %v620 = vadd.f32 %v488, %v588
    %v621 = vadd.f32 %v489, %v589
    %v622 = vadd.f32 %v490, %v590
    %v623 = vadd.f32 %v491, %v591
    %v624 = vadd.f32 %v492, %v592
    %vm625 = vcmp.gt.f32.partialorder %v593, 0.0
    %vm626 = vcmp.gt.f32.partialorder %v594, 0.0
    %vm627 = vcmp.gt.f32.partialorder %v595, 0.0
    %vm628 = vcmp.gt.f32.partialorder %v596, 0.0
    %vm629 = vcmp.gt.f32.partialorder %v597, 0.0
    %vm630 = vcmp.gt.f32.partialorder %v598, 0.0
    %vm631 = vcmp.gt.f32.partialorder %v599, 0.0
    %vm632 = vcmp.gt.f32.partialorder %v600, 0.0
    %vm633 = vcmp.gt.f32.partialorder %v601, 0.0
    %vm634 = vcmp.gt.f32.partialorder %v602, 0.0
    %vm635 = vcmp.gt.f32.partialorder %v603, 0.0
    %vm636 = vcmp.gt.f32.partialorder %v604, 0.0
    %vm637 = vcmp.gt.f32.partialorder %v605, 0.0
    %vm638 = vcmp.gt.f32.partialorder %v606, 0.0
    %vm639 = vcmp.gt.f32.partialorder %v607, 0.0
    %vm640 = vcmp.gt.f32.partialorder %v608, 0.0
    %vm641 = vcmp.gt.f32.partialorder %v609, 0.0
    %vm642 = vcmp.gt.f32.partialorder %v610, 0.0
    %vm643 = vcmp.gt.f32.partialorder %v611, 0.0
    %vm644 = vcmp.gt.f32.partialorder %v612, 0.0
    %vm645 = vcmp.gt.f32.partialorder %v613, 0.0
    %vm646 = vcmp.gt.f32.partialorder %v614, 0.0
    %vm647 = vcmp.gt.f32.partialorder %v615, 0.0
    %vm648 = vcmp.gt.f32.partialorder %v616, 0.0
    %vm649 = vcmp.gt.f32.partialorder %v617, 0.0
    %vm650 = vcmp.gt.f32.partialorder %v618, 0.0
    %vm651 = vcmp.gt.f32.partialorder %v619, 0.0
    %vm652 = vcmp.gt.f32.partialorder %v620, 0.0
    %vm653 = vcmp.gt.f32.partialorder %v621, 0.0
    %vm654 = vcmp.gt.f32.partialorder %v622, 0.0
    %vm655 = vcmp.gt.f32.partialorder %v623, 0.0
    %vm656 = vcmp.gt.f32.partialorder %v624, 0.0
    %v657 = vmul.f32 %v593, 0.01
    %v658 = vmul.f32 %v594, 0.01
    %v659 = vmul.f32 %v595, 0.01
    %v660 = vmul.f32 %v596, 0.01
    %v661 = vmul.f32 %v597, 0.01
    %v662 = vmul.f32 %v598, 0.01
    %v663 = vmul.f32 %v599, 0.01
    %v664 = vmul.f32 %v600, 0.01
    %v665 = vmul.f32 %v601, 0.01
    %v666 = vmul.f32 %v602, 0.01
    %v667 = vmul.f32 %v603, 0.01
    %v668 = vmul.f32 %v604, 0.01
    %v669 = vmul.f32 %v605, 0.01
    %v670 = vmul.f32 %v606, 0.01
    %v671 = vmul.f32 %v607, 0.01
    %v672 = vmul.f32 %v608, 0.01
    %v673 = vmul.f32 %v609, 0.01
    %v674 = vmul.f32 %v610, 0.01
    %v675 = vmul.f32 %v611, 0.01
    %v676 = vmul.f32 %v612, 0.01
    %v677 = vmul.f32 %v613, 0.01
    %v678 = vmul.f32 %v614, 0.01
    %v679 = vmul.f32 %v615, 0.01
    %v680 = vmul.f32 %v616, 0.01
    %v681 = vmul.f32 %v617, 0.01
    %v682 = vmul.f32 %v618, 0.01
    %v683 = vmul.f32 %v619, 0.01
    %v684 = vmul.f32 %v620, 0.01
    %v685 = vmul.f32 %v621, 0.01
    %v686 = vmul.f32 %v622, 0.01
    %v687 = vmul.f32 %v623, 0.01
    %v688 = vmul.f32 %v624, 0.01
    %v689 = vsel %vm625, %v593, %v657
    %v690 = vsel %vm626, %v594, %v658
    %v691 = vsel %vm627, %v595, %v659
    %v692 = vsel %vm628, %v596, %v660
    %v693 = vsel %vm629, %v597, %v661
    %v694 = vsel %vm630, %v598, %v662
    %v695 = vsel %vm631, %v599, %v663
    %v696 = vsel %vm632, %v600, %v664
    %v697 = vsel %vm633, %v601, %v665
    %v698 = vsel %vm634, %v602, %v666
    %v699 = vsel %vm635, %v603, %v667
    %v700 = vsel %vm636, %v604, %v668
    %v701 = vsel %vm637, %v605, %v669
    %v702 = vsel %vm638, %v606, %v670
    %v703 = vsel %vm639, %v607, %v671
    %v704 = vsel %vm640, %v608, %v672
    %v705 = vsel %vm641, %v609, %v673
    %v706 = vsel %vm642, %v610, %v674
    %v707 = vsel %vm643, %v611, %v675
    %v708 = vsel %vm644, %v612, %v676
    %v709 = vsel %vm645, %v613, %v677
    %v710 = vsel %vm646, %v614, %v678
    %v711 = vsel %vm647, %v615, %v679
    %v712 = vsel %vm648, %v616, %v680
    %v713 = vsel %vm649, %v617, %v681
    %v714 = vsel %vm650, %v618, %v682
    %v715 = vsel %vm651, %v619, %v683
    %v716 = vsel %vm652, %v620, %v684
    %v717 = vsel %vm653, %v621, %v685
    %v718 = vsel %vm654, %v622, %v686
    %v719 = vsel %vm655, %v623, %v687
    %v720 = vsel %vm656, %v624, %v688
    %v721 = vld [vmem:[%s3] sm:$0xff]
    %v722 = vld [vmem:[%s3 + $0x8] sm:$0xff]
    %v723 = vld [vmem:[%s3 + $0x10] sm:$0xff]
    %v724 = vld [vmem:[%s3 + $0x18] sm:$0xff]
    %v725 = vld [vmem:[%s4] sm:$0xff]
    %v726 = vld [vmem:[%s4 + $0x8] sm:$0xff]
    %v727 = vld [vmem:[%s4 + $0x10] sm:$0xff]
    %v728 = vld [vmem:[%s4 + $0x18] sm:$0xff]
    %730 = vset.pattern.permute.xlu0 0
    %731 = vperm.xlu0 %730, %v725
    %v732 = vpop.permute.xlu0 %731
    %735 = vset.pattern.permute.xlu0 0
    %736 = vperm.xlu0 %735, %v726
    %v737 = vpop.permute.xlu0 %736
    %740 = vset.pattern.permute.xlu0 0
    %741 = vperm.xlu0 %740, %v727
    %v742 = vpop.permute.xlu0 %741
    %745 = vset.pattern.permute.xlu0 0
    %746 = vperm.xlu0 %745, %v728
    %v747 = vpop.permute.xlu0 %746
    %vm749 = vcmask 523264
    %v751 = vsel %vm749, %v721, 0
    %v754 = vsel %vm749, %v722, 0
    %v757 = vsel %vm749, %v723, 0
    %v760 = vsel %vm749, %v724, 0
    %762 = vmatprep.subr.mxu0 0.0
    %763 = vmatpush1.msra.mxu0 0.0
    %764 = vmatprep.subr.mxu0 0.0
    %765 = vmatpush1.msra.mxu0 0.0
    %766 = vmatprep.subr.mxu0 0.0
    %767 = vmatpush1.msra.mxu0 0.0
    %768 = vmatprep.subr.mxu0 0.0
    %769 = vmatpush1.msra.mxu0 0.0
    %770 = vmatprep.subr.mxu0 0.0
    %771 = vmatpush1.msra.mxu0 0.0
    %772 = vmatprep.subr.mxu0 0.0
    %773 = vmatpush1.msra.mxu0 0.0
    %774 = vmatprep.subr.mxu0 0.0
    %775 = vmatpush1.msra.mxu0 0.0
    %776 = vmatprep.subr.mxu0 0.0
    %777 = vmatpush1.msra.mxu0 0.0
    %778 = vmatprep.subr.mxu0 %v718
    %779 = vmatpush1.msra.mxu0 %v717
    %780 = vmatprep.subr.mxu0 %v714
    %781 = vmatpush1.msra.mxu0 %v713
    %782 = vmatprep.subr.mxu0 %v710
    %783 = vmatpush1.msra.mxu0 %v709
    %784 = vmatprep.subr.mxu0 %v706
    %785 = vmatpush1.msra.mxu0 %v705
    %786 = vmatprep.subr.mxu0 %v702
    %787 = vmatpush1.msra.mxu0 %v701
    %788 = vmatprep.subr.mxu0 %v698
    %789 = vmatpush1.msra.mxu0 %v697
    %790 = vmatprep.subr.mxu0 %v694
    %791 = vmatpush1.msra.mxu0 %v693
    %792 = vmatprep.subr.mxu0 %v690
    %793 = vmatpush1.msra.mxu0 %v689
    %794 = vmatprep.subr.mxu0 0.0
    %795 = vmatpush2.msra.mxu0 0.0
    %796 = vmatprep.subr.mxu0 0.0
    %797 = vmatpush2.msra.mxu0 0.0
    %798 = vmatprep.subr.mxu0 0.0
    %799 = vmatpush2.msra.mxu0 0.0
    %800 = vmatprep.subr.mxu0 0.0
    %801 = vmatpush2.msra.mxu0 0.0
    %802 = vmatprep.subr.mxu0 0.0
    %803 = vmatpush2.msra.mxu0 0.0
    %804 = vmatprep.subr.mxu0 0.0
    %805 = vmatpush2.msra.mxu0 0.0
    %806 = vmatprep.subr.mxu0 0.0
    %807 = vmatpush2.msra.mxu0 0.0
    %808 = vmatprep.subr.mxu0 0.0
    %809 = vmatpush2.msra.mxu0 0.0
    %810 = vmatprep.subr.mxu0 0.0
    %811 = vmatpush2.msra.mxu0 0.0
    %812 = vmatprep.subr.mxu0 0.0
    %813 = vmatpush2.msra.mxu0 0.0
    %814 = vmatprep.subr.mxu0 0.0
    %815 = vmatpush2.msra.mxu0 0.0
    %816 = vmatprep.subr.mxu0 0.0
    %817 = vmatpush2.msra.mxu0 0.0
    %818 = vmatprep.subr.mxu0 0.0
    %819 = vmatpush2.msra.mxu0 0.0
    %820 = vmatprep.subr.mxu0 0.0
    %821 = vmatpush2.msra.mxu0 0.0
    %822 = vmatprep.subr.mxu0 0.0
    %823 = vmatpush2.msra.mxu0 0.0
    %824 = vmatprep.subr.mxu0 0.0
    %825 = vmatpush2.msra.mxu0 0.0
    %826 = vmatprep.mubr.f32.mxu0 0.0
    %827 = vmatmul.mubr.f32.gmra.mxu0 %v751
    %v828 = vpop.f32.mrf.mxu0
    %v829 = vadd.f32 %v732, %v828
    %v830 = vpop.f32.mrf.mxu0
    %v831 = vadd.f32 %v732, %v830
    %832 = vmatprep.mubr.f32.mxu0 0.0
    %833 = vmatmul.mubr.f32.gmra.mxu0 %v754
    %v834 = vpop.f32.mrf.mxu0
    %v835 = vadd.f32 %v737, %v834
    %v836 = vpop.f32.mrf.mxu0
    %v837 = vadd.f32 %v737, %v836
    %838 = vmatprep.mubr.f32.mxu0 0.0
    %839 = vmatmul.mubr.f32.gmra.mxu0 %v757
    %v840 = vpop.f32.mrf.mxu0
    %v841 = vadd.f32 %v742, %v840
    %v842 = vpop.f32.mrf.mxu0
    %v843 = vadd.f32 %v742, %v842
    %844 = vmatprep.mubr.f32.mxu0 0.0
    %845 = vmatmul.mubr.f32.gmra.mxu0 %v760
    %v846 = vpop.f32.mrf.mxu0
    %v847 = vadd.f32 %v747, %v846
    %v848 = vpop.f32.mrf.mxu0
    %v849 = vadd.f32 %v747, %v848
    %850 = vdwg.mxu0
    %851 = vmatprep.subr.mxu0 0.0
    %852 = vmatpush1.msra.mxu0 0.0
    %853 = vmatprep.subr.mxu0 0.0
    %854 = vmatpush1.msra.mxu0 0.0
    %855 = vmatprep.subr.mxu0 0.0
    %856 = vmatpush1.msra.mxu0 0.0
    %857 = vmatprep.subr.mxu0 0.0
    %858 = vmatpush1.msra.mxu0 0.0
    %859 = vmatprep.subr.mxu0 0.0
    %860 = vmatpush1.msra.mxu0 0.0
    %861 = vmatprep.subr.mxu0 0.0
    %862 = vmatpush1.msra.mxu0 0.0
    %863 = vmatprep.subr.mxu0 0.0
    %864 = vmatpush1.msra.mxu0 0.0
    %865 = vmatprep.subr.mxu0 0.0
    %866 = vmatpush1.msra.mxu0 0.0
    %867 = vmatprep.subr.mxu0 %v720
    %868 = vmatpush1.msra.mxu0 %v719
    %869 = vmatprep.subr.mxu0 %v716
    %870 = vmatpush1.msra.mxu0 %v715
    %871 = vmatprep.subr.mxu0 %v712
    %872 = vmatpush1.msra.mxu0 %v711
    %873 = vmatprep.subr.mxu0 %v708
    %874 = vmatpush1.msra.mxu0 %v707
    %875 = vmatprep.subr.mxu0 %v704
    %876 = vmatpush1.msra.mxu0 %v703
    %877 = vmatprep.subr.mxu0 %v700
    %878 = vmatpush1.msra.mxu0 %v699
    %879 = vmatprep.subr.mxu0 %v696
    %880 = vmatpush1.msra.mxu0 %v695
    %881 = vmatprep.subr.mxu0 %v692
    %882 = vmatpush1.msra.mxu0 %v691
    %883 = vmatprep.subr.mxu0 0.0
    %884 = vmatpush2.msra.mxu0 0.0
    %885 = vmatprep.subr.mxu0 0.0
    %886 = vmatpush2.msra.mxu0 0.0
    %887 = vmatprep.subr.mxu0 0.0
    %888 = vmatpush2.msra.mxu0 0.0
    %889 = vmatprep.subr.mxu0 0.0
    %890 = vmatpush2.msra.mxu0 0.0
    %891 = vmatprep.subr.mxu0 0.0
    %892 = vmatpush2.msra.mxu0 0.0
    %893 = vmatprep.subr.mxu0 0.0
    %894 = vmatpush2.msra.mxu0 0.0
    %895 = vmatprep.subr.mxu0 0.0
    %896 = vmatpush2.msra.mxu0 0.0
    %897 = vmatprep.subr.mxu0 0.0
    %898 = vmatpush2.msra.mxu0 0.0
    %899 = vmatprep.subr.mxu0 0.0
    %900 = vmatpush2.msra.mxu0 0.0
    %901 = vmatprep.subr.mxu0 0.0
    %902 = vmatpush2.msra.mxu0 0.0
    %903 = vmatprep.subr.mxu0 0.0
    %904 = vmatpush2.msra.mxu0 0.0
    %905 = vmatprep.subr.mxu0 0.0
    %906 = vmatpush2.msra.mxu0 0.0
    %907 = vmatprep.subr.mxu0 0.0
    %908 = vmatpush2.msra.mxu0 0.0
    %909 = vmatprep.subr.mxu0 0.0
    %910 = vmatpush2.msra.mxu0 0.0
    %911 = vmatprep.subr.mxu0 0.0
    %912 = vmatpush2.msra.mxu0 0.0
    %913 = vmatprep.subr.mxu0 0.0
    %914 = vmatpush2.msra.mxu0 0.0
    %915 = vmatprep.mubr.f32.mxu0 0.0
    %916 = vmatmul.mubr.f32.gmra.mxu0 %v751
    %v917 = vpop.f32.mrf.mxu0
    %v918 = vadd.f32 %v732, %v917
    %v919 = vpop.f32.mrf.mxu0
    %v920 = vadd.f32 %v732, %v919
    %921 = vmatprep.mubr.f32.mxu0 0.0
    %922 = vmatmul.mubr.f32.gmra.mxu0 %v754
    %v923 = vpop.f32.mrf.mxu0
    %v924 = vadd.f32 %v737, %v923
    %v925 = vpop.f32.mrf.mxu0
    %v926 = vadd.f32 %v737, %v925
    %927 = vmatprep.mubr.f32.mxu0 0.0
    %928 = vmatmul.mubr.f32.gmra.mxu0 %v757
    %v929 = vpop.f32.mrf.mxu0
    %v930 = vadd.f32 %v742, %v929
    %v931 = vpop.f32.mrf.mxu0
    %v932 = vadd.f32 %v742, %v931
    %933 = vmatprep.mubr.f32.mxu0 0.0
    %934 = vmatmul.mubr.f32.gmra.mxu0 %v760
    %v935 = vpop.f32.mrf.mxu0
    %v936 = vadd.f32 %v747, %v935
    %v937 = vpop.f32.mrf.mxu0
    %v938 = vadd.f32 %v747, %v937
    %939 = vdwg.mxu0
    %vm940 = vcmp.gt.f32.partialorder %v829, 0.0
    %vm941 = vcmp.gt.f32.partialorder %v831, 0.0
    %vm942 = vcmp.gt.f32.partialorder %v918, 0.0
    %vm943 = vcmp.gt.f32.partialorder %v920, 0.0
    %vm944 = vcmp.gt.f32.partialorder %v835, 0.0
    %vm945 = vcmp.gt.f32.partialorder %v837, 0.0
    %vm946 = vcmp.gt.f32.partialorder %v924, 0.0
    %vm947 = vcmp.gt.f32.partialorder %v926, 0.0
    %vm948 = vcmp.gt.f32.partialorder %v841, 0.0
    %vm949 = vcmp.gt.f32.partialorder %v843, 0.0
    %vm950 = vcmp.gt.f32.partialorder %v930, 0.0
    %vm951 = vcmp.gt.f32.partialorder %v932, 0.0
    %vm952 = vcmp.gt.f32.partialorder %v847, 0.0
    %vm953 = vcmp.gt.f32.partialorder %v849, 0.0
    %vm954 = vcmp.gt.f32.partialorder %v936, 0.0
    %vm955 = vcmp.gt.f32.partialorder %v938, 0.0
    %v956 = vmul.f32 %v829, 0.01
    %v957 = vmul.f32 %v831, 0.01
    %v958 = vmul.f32 %v918, 0.01
    %v959 = vmul.f32 %v920, 0.01
    %v960 = vmul.f32 %v835, 0.01
    %v961 = vmul.f32 %v837, 0.01
    %v962 = vmul.f32 %v924, 0.01
    %v963 = vmul.f32 %v926, 0.01
    %v964 = vmul.f32 %v841, 0.01
    %v965 = vmul.f32 %v843, 0.01
    %v966 = vmul.f32 %v930, 0.01
    %v967 = vmul.f32 %v932, 0.01
    %v968 = vmul.f32 %v847, 0.01
    %v969 = vmul.f32 %v849, 0.01
    %v970 = vmul.f32 %v936, 0.01
    %v971 = vmul.f32 %v938, 0.01
    %v972 = vsel %vm940, %v829, %v956
    %v973 = vsel %vm941, %v831, %v957
    %v974 = vsel %vm942, %v918, %v958
    %v975 = vsel %vm943, %v920, %v959
    %v976 = vsel %vm944, %v835, %v960
    %v977 = vsel %vm945, %v837, %v961
    %v978 = vsel %vm946, %v924, %v962
    %v979 = vsel %vm947, %v926, %v963
    %v980 = vsel %vm948, %v841, %v964
    %v981 = vsel %vm949, %v843, %v965
    %v982 = vsel %vm950, %v930, %v966
    %v983 = vsel %vm951, %v932, %v967
    %v984 = vsel %vm952, %v847, %v968
    %v985 = vsel %vm953, %v849, %v969
    %v986 = vsel %vm954, %v936, %v970
    %v987 = vsel %vm955, %v938, %v971
    %v988 = vld [vmem:[%s5] sm:$0x1]
    %v989 = vld [vmem:[#allocation2] sm:$0x1]
    %991 = vset.pattern.permute.xlu0 0
    %992 = vperm.xlu0 %991, %v989
    %v993 = vpop.permute.xlu0 %992
    %v995 = vlaneseq
    %v996 = vshrl.u32 %v995, 7
    %v997 = vsub.s32 0, %v996
    %v998 = vrot.slane %v993, %v997
    %vm999 = vcmask 261120
    %v1001 = vsel %vm999, %v988, 0
    %1003 = vmatprep.subr.mxu0 0.0
    %1004 = vmatpush1.msra.mxu0 0.0
    %1005 = vmatprep.subr.mxu0 0.0
    %1006 = vmatpush1.msra.mxu0 0.0
    %1007 = vmatprep.subr.mxu0 0.0
    %1008 = vmatpush1.msra.mxu0 0.0
    %1009 = vmatprep.subr.mxu0 0.0
    %1010 = vmatpush1.msra.mxu0 0.0
    %1011 = vmatprep.subr.mxu0 0.0
    %1012 = vmatpush1.msra.mxu0 0.0
    %1013 = vmatprep.subr.mxu0 0.0
    %1014 = vmatpush1.msra.mxu0 0.0
    %1015 = vmatprep.subr.mxu0 0.0
    %1016 = vmatpush1.msra.mxu0 0.0
    %1017 = vmatprep.subr.mxu0 0.0
    %1018 = vmatpush1.msra.mxu0 0.0
    %1019 = vmatprep.subr.mxu0 0.0
    %1020 = vmatpush1.msra.mxu0 0.0
    %1021 = vmatprep.subr.mxu0 0.0
    %1022 = vmatpush1.msra.mxu0 0.0
    %1023 = vmatprep.subr.mxu0 0.0
    %1024 = vmatpush1.msra.mxu0 0.0
    %1025 = vmatprep.subr.mxu0 0.0
    %1026 = vmatpush1.msra.mxu0 0.0
    %1027 = vmatprep.subr.mxu0 %v985
    %1028 = vmatpush1.msra.mxu0 %v984
    %1029 = vmatprep.subr.mxu0 %v981
    %1030 = vmatpush1.msra.mxu0 %v980
    %1031 = vmatprep.subr.mxu0 %v977
    %1032 = vmatpush1.msra.mxu0 %v976
    %1033 = vmatprep.subr.mxu0 %v973
    %1034 = vmatpush1.msra.mxu0 %v972
    %1035 = vmatprep.subr.mxu0 0.0
    %1036 = vmatpush2.msra.mxu0 0.0
    %1037 = vmatprep.subr.mxu0 0.0
    %1038 = vmatpush2.msra.mxu0 0.0
    %1039 = vmatprep.subr.mxu0 0.0
    %1040 = vmatpush2.msra.mxu0 0.0
    %1041 = vmatprep.subr.mxu0 0.0
    %1042 = vmatpush2.msra.mxu0 0.0
    %1043 = vmatprep.subr.mxu0 0.0
    %1044 = vmatpush2.msra.mxu0 0.0
    %1045 = vmatprep.subr.mxu0 0.0
    %1046 = vmatpush2.msra.mxu0 0.0
    %1047 = vmatprep.subr.mxu0 0.0
    %1048 = vmatpush2.msra.mxu0 0.0
    %1049 = vmatprep.subr.mxu0 0.0
    %1050 = vmatpush2.msra.mxu0 0.0
    %1051 = vmatprep.subr.mxu0 0.0
    %1052 = vmatpush2.msra.mxu0 0.0
    %1053 = vmatprep.subr.mxu0 0.0
    %1054 = vmatpush2.msra.mxu0 0.0
    %1055 = vmatprep.subr.mxu0 0.0
    %1056 = vmatpush2.msra.mxu0 0.0
    %1057 = vmatprep.subr.mxu0 0.0
    %1058 = vmatpush2.msra.mxu0 0.0
    %1059 = vmatprep.subr.mxu0 0.0
    %1060 = vmatpush2.msra.mxu0 0.0
    %1061 = vmatprep.subr.mxu0 0.0
    %1062 = vmatpush2.msra.mxu0 0.0
    %1063 = vmatprep.subr.mxu0 0.0
    %1064 = vmatpush2.msra.mxu0 0.0
    %1065 = vmatprep.subr.mxu0 0.0
    %1066 = vmatpush2.msra.mxu0 0.0
    %1067 = vmatprep.mubr.f32.mxu0 0.0
    %1068 = vmatmul.mubr.f32.gmra.mxu0 %v1001
    %v1069 = vpop.f32.mrf.mxu0
    %v1070 = vadd.f32 %v998, %v1069
    %v1071 = vpop.f32.mrf.mxu0
    %v1072 = vadd.f32 %v998, %v1071
    %1073 = vdwg.mxu0
    %1074 = vmatprep.subr.mxu0 0.0
    %1075 = vmatpush1.msra.mxu0 0.0
    %1076 = vmatprep.subr.mxu0 0.0
    %1077 = vmatpush1.msra.mxu0 0.0
    %1078 = vmatprep.subr.mxu0 0.0
    %1079 = vmatpush1.msra.mxu0 0.0
    %1080 = vmatprep.subr.mxu0 0.0
    %1081 = vmatpush1.msra.mxu0 0.0
    %1082 = vmatprep.subr.mxu0 0.0
    %1083 = vmatpush1.msra.mxu0 0.0
    %1084 = vmatprep.subr.mxu0 0.0
    %1085 = vmatpush1.msra.mxu0 0.0
    %1086 = vmatprep.subr.mxu0 0.0
    %1087 = vmatpush1.msra.mxu0 0.0
    %1088 = vmatprep.subr.mxu0 0.0
    %1089 = vmatpush1.msra.mxu0 0.0
    %1090 = vmatprep.subr.mxu0 0.0
    %1091 = vmatpush1.msra.mxu0 0.0
    %1092 = vmatprep.subr.mxu0 0.0
    %1093 = vmatpush1.msra.mxu0 0.0
    %1094 = vmatprep.subr.mxu0 0.0
    %1095 = vmatpush1.msra.mxu0 0.0
    %1096 = vmatprep.subr.mxu0 0.0
    %1097 = vmatpush1.msra.mxu0 0.0
    %1098 = vmatprep.subr.mxu0 %v987
    %1099 = vmatpush1.msra.mxu0 %v986
    %1100 = vmatprep.subr.mxu0 %v983
    %1101 = vmatpush1.msra.mxu0 %v982
    %1102 = vmatprep.subr.mxu0 %v979
    %1103 = vmatpush1.msra.mxu0 %v978
    %1104 = vmatprep.subr.mxu0 %v975
    %1105 = vmatpush1.msra.mxu0 %v974
    %1106 = vmatprep.subr.mxu0 0.0
    %1107 = vmatpush2.msra.mxu0 0.0
    %1108 = vmatprep.subr.mxu0 0.0
    %1109 = vmatpush2.msra.mxu0 0.0
    %1110 = vmatprep.subr.mxu0 0.0
    %1111 = vmatpush2.msra.mxu0 0.0
    %1112 = vmatprep.subr.mxu0 0.0
    %1113 = vmatpush2.msra.mxu0 0.0
    %1114 = vmatprep.subr.mxu0 0.0
    %1115 = vmatpush2.msra.mxu0 0.0
    %1116 = vmatprep.subr.mxu0 0.0
    %1117 = vmatpush2.msra.mxu0 0.0
    %1118 = vmatprep.subr.mxu0 0.0
    %1119 = vmatpush2.msra.mxu0 0.0
    %1120 = vmatprep.subr.mxu0 0.0
    %1121 = vmatpush2.msra.mxu0 0.0
    %1122 = vmatprep.subr.mxu0 0.0
    %1123 = vmatpush2.msra.mxu0 0.0
    %1124 = vmatprep.subr.mxu0 0.0
    %1125 = vmatpush2.msra.mxu0 0.0
    %1126 = vmatprep.subr.mxu0 0.0
    %1127 = vmatpush2.msra.mxu0 0.0
    %1128 = vmatprep.subr.mxu0 0.0
    %1129 = vmatpush2.msra.mxu0 0.0
    %1130 = vmatprep.subr.mxu0 0.0
    %1131 = vmatpush2.msra.mxu0 0.0
    %1132 = vmatprep.subr.mxu0 0.0
    %1133 = vmatpush2.msra.mxu0 0.0
    %1134 = vmatprep.subr.mxu0 0.0
    %1135 = vmatpush2.msra.mxu0 0.0
    %1136 = vmatprep.subr.mxu0 0.0
    %1137 = vmatpush2.msra.mxu0 0.0
    %1138 = vmatprep.mubr.f32.mxu0 0.0
    %1139 = vmatmul.mubr.f32.gmra.mxu0 %v1001
    %v1140 = vpop.f32.mrf.mxu0
    %v1141 = vadd.f32 %v998, %v1140
    %v1142 = vpop.f32.mrf.mxu0
    %v1143 = vadd.f32 %v998, %v1142
    %1144 = vdwg.mxu0
    %v1145 = vsub.f32 0.0, %v1070
    %v1146 = vsub.f32 0.0, %v1072
    %v1147 = vsub.f32 0.0, %v1141
    %v1148 = vsub.f32 0.0, %v1143
    %v1149 = vmul.f32 %v1145, 1.442695
    %v1150 = vpow.pop %v1149
    %v1151 = vmul.f32 %v1146, 1.442695
    %v1152 = vpow.pop %v1151
    %v1153 = vmul.f32 %v1147, 1.442695
    %v1154 = vpow.pop %v1153
    %v1155 = vmul.f32 %v1148, 1.442695
    %v1156 = vpow.pop %v1155
    %v1157 = vadd.f32 %v1150, 1.0
    %v1158 = vadd.f32 %v1152, 1.0
    %v1159 = vadd.f32 %v1154, 1.0
    %v1160 = vadd.f32 %v1156, 1.0
    %v1161 = vrcp.pop %v1157
    %v1162 = vmul.f32 1.0, %v1161
    %v1163 = vrcp.pop %v1158
    %v1164 = vmul.f32 1.0, %v1163
    %v1165 = vrcp.pop %v1159
    %v1166 = vmul.f32 1.0, %v1165
    %v1167 = vrcp.pop %v1160
    %v1168 = vmul.f32 1.0, %v1167
    %v1169 = vsub.f32 1.0, %v1162
    %v1170 = vsub.f32 1.0, %v1164
    %v1171 = vsub.f32 1.0, %v1166
    %v1172 = vsub.f32 1.0, %v1168
    %v1177 = vrot.slane %v1169, 7
    %v1178 = vrot.slane %v1170, 7
    %v1179 = vrot.slane %v1171, 7
    %v1180 = vrot.slane %v1172, 7
    %vm1185 = vcmask 1040384
    %v1186 = vsel %vm1185, %v1162, %v1177
    %v1187 = vsel %vm1185, %v1164, %v1178
    %v1188 = vsel %vm1185, %v1166, %v1179
    %v1189 = vsel %vm1185, %v1168, %v1180
    %v1194 = vcombine.low %v1186, %v1187
    %v1195 = vcombine.low %v1188, %v1189
    %v1197 = vunpack.c.l.s4 1983009808
    %v1198 = vunpack.c.0.s8 %v1197
    %v1199 = vlaneseq
    %v1200 = vshrl.u32 %v1199, 7
    %v1201 = vsub.s32 %v1198, %v1200
    %v1202 = vrot.slane %v1194, %v1201
    %v1204 = vunpack.c.l.s4 1983009808
    %v1205 = vunpack.c.0.s8 %v1204
    %v1206 = vlaneseq
    %v1207 = vshrl.u32 %v1206, 7
    %v1208 = vsub.s32 %v1205, %v1207
    %v1209 = vrot.slane %v1195, %v1208
    %v1210 = vcombine.low %v1202, %v1209
    %1212 = vst [vmem:[#allocation3] sm:$0xff] %v1210
    // Predicated region
    $region30: #{tpu_custom_call.1} parent=1 // pred_check
      _
    $region31: #{tpu_custom_call.1} parent=1 // pred_check_branch
      %1214 = sbr.rel (0) target = $region33
    $region32: #{tpu_custom_call.1} parent=1 // pred_region
      %s1216 = ssub.s32 128, 128
      %1217 = vsyncadd [#allocation4], %s1216
      %s1219 = sshll.u32 [#allocation3], 4
      %s1220 = int_to_ptr.vmem [resolvable:$true] %s1219
      %1222 = dma.vmem_to_hbm [thread:$0]  %s1220, 128, %s7, [#allocation4]
    $region33: #{tpu_custom_call.1} parent=1 // pred_fallthru
      _
    // Predicated region
    $region34: #{tpu_custom_call.1} parent=1 // pred_check
      _
    $region35: #{tpu_custom_call.1} parent=1 // pred_check_branch
      %1224 = sbr.rel (0) target = $region37
    $region36: #{tpu_custom_call.1} parent=1 // pred_region
      %1225 = dma.done [#allocation4], 128
    $region37: #{tpu_custom_call.1} parent=1 // pred_fallthru
      _
    %1226 = vsyncpa [#allocation4], 1

</llo_original>
